<compile_context>
chip_gen: v5e
topology: v5e:2x2
jax: 0.10.0
libtpu: 0.0.40
codegen_flags: <defaults>
</compile_context>

<pallas_src>
import functools

import jax
import jax.numpy as jnp
from jax.experimental import pallas as pl
from jax.experimental.pallas import tpu as pltpu


_VMEM_BUDGET_BYTES = 40 * 1024 * 1024   # kernel working-set target (v7x 64 MiB safe)
_VMEM_LIMIT_BYTES = 48 * 1024 * 1024    # scoped limit handed to Mosaic


def _round_up(x, m):
    return ((x + m - 1) // m) * m


def mlp_kernel(x_ref, w1_ref, b1_ref, w2_ref, b2_ref, o_ref, acc_ref):
    """One (tm x tk) tile of x against a (tk x Hp) slice of W1, K-accumulated.

    Grid = (batch_tiles, k_tiles); the K axis is last ("arbitrary") and the f32
    accumulator lives in VMEM scratch across it.  ReLU + fc2 + bias happen once,
    on the final K step, producing a lane-dense (tm, Cp) output tile.
    """
    k = pl.program_id(1)
    nk = pl.num_programs(1)

    @pl.when(k == 0)
    def _init():
        # Fuse the fc1 bias into the accumulator init (saves a full-tile VPU add).
        acc_ref[...] = jnp.broadcast_to(
            b1_ref[...], acc_ref.shape).astype(jnp.float32)

    # fc1 partial product on the MXU; x is cast to the weight dtype per tile on
    # the VPU (lets aligned x skip any wrapper-side HBM round trip).
    acc_ref[...] += jnp.dot(
        x_ref[...].astype(w1_ref.dtype), w1_ref[...],
        preferred_element_type=jnp.float32)

    @pl.when(k == nk - 1)
    def _finalize():
        h = jnp.maximum(acc_ref[...], 0.0)                    # ReLU (VPU, f32)
        out = jnp.dot(h.astype(w2_ref.dtype), w2_ref[...],    # fc2 (MXU)
                      preferred_element_type=jnp.float32)
        o_ref[...] = (out + b2_ref[...]).astype(o_ref.dtype)


def prepare_params(w1, b1, w2, b2, *, use_bf16=True,
                   target_w1_block_bytes=2 * 1024 * 1024):
    """Pad + cast the model weights ONCE, at load time (outside the hot path)."""
    D, H = w1.shape
    C = w2.shape[1]
    mm_dtype = jnp.bfloat16 if use_bf16 else jnp.dtype(w1.dtype)
    w_isz = jnp.dtype(mm_dtype).itemsize

    Hp = _round_up(H, 128)
    Cp = _round_up(max(C, 128), 128)      # lane-dense output (2 classes -> 128 lanes)
    # K tile: each W1 block carries ~target_w1_block_bytes so the per-step DMA
    # dwarfs the fixed ~0.35 us pipeline overhead (tk ~ 8192 for Hp=128 bf16).
    tk = _round_up(max(target_w1_block_bytes // (Hp * w_isz), 128), 128)
    tk = min(tk, _round_up(D, 128))
    Dp = _round_up(D, tk)

    def pad2(a, shape, dtype):
        a = jnp.asarray(a).astype(dtype)
        if a.shape == shape:
            return a                       # already aligned: skip the copy entirely
        return jnp.zeros(shape, dtype).at[:a.shape[0], :a.shape[1]].set(a)

    b1 = jnp.asarray(b1, jnp.float32).reshape(1, -1)
    b2 = jnp.asarray(b2, jnp.float32).reshape(1, -1)
    return {
        "w1": pad2(w1, (Dp, Hp), mm_dtype),
        "b1": pad2(b1, (1, Hp), jnp.float32),
        "w2": pad2(w2, (Hp, Cp), mm_dtype),
        "b2": pad2(b2, (1, Cp), jnp.float32),
        "D": int(D), "C": int(C), "tk": int(tk),
    }


def _choose_tm(B, tk, Hp, Cp, x_itemsize, w_itemsize):
    """Largest batch tile (multiple of 16) whose working set fits the VMEM budget.

    W1 is re-streamed from HBM once per batch tile, so we want n_m == 1 whenever
    VMEM allows; padded batch rows are free in the W1-streaming-bound regime.
    """
    fixed = (2 * tk * Hp * w_itemsize        # W1 double buffer
             + 2 * Hp * Cp * w_itemsize      # W2 (resident, default double buffer)
             + 4 * (Hp + Cp) * 2)            # biases
    per_row = (2 * tk * x_itemsize           # x double buffer
               + Hp * 4                      # f32 fc1 accumulator
               + 2 * Cp * 4)                 # f32 output double buffer
    tm_cap = max(16, ((_VMEM_BUDGET_BYTES - fixed) // per_row) // 16 * 16)
    tm = min(_round_up(max(B, 16), 16), tm_cap)
    return int(tm)


@functools.partial(jax.jit, static_argnames=("D", "C", "tk", "tm"))
def _forward_impl(x, w1p, b1p, w2p, b2p, *, D, C, tk, tm):
    B = x.shape[0]
    Dp, Hp = w1p.shape
    Cp = w2p.shape[1]
    mm_dtype = w1p.dtype
    Bp = _round_up(B, tm)

    # Pad x only when its shape is not tile-aligned (Python branch on static
    # shapes).  On the aligned path x reaches the kernel in its native dtype
    # with zero extra HBM traffic; the cast happens per-tile in-kernel.
    if (B, D) != (Bp, Dp):
        xp = jnp.zeros((Bp, Dp), mm_dtype).at[:B, :D].set(x.astype(mm_dtype))
    else:
        xp = x

    n_m = Bp // tm
    n_k = Dp // tk

    x_isz = jnp.dtype(xp.dtype).itemsize
    w_isz = jnp.dtype(mm_dtype).itemsize
    cost = pl.CostEstimate(
        flops=2 * Bp * (Dp * Hp + Hp * Cp),
        transcendentals=0,
        bytes_accessed=(Bp * Dp * x_isz            # x streamed once
                        + n_m * Dp * Hp * w_isz    # W1 re-streamed per batch tile
                        + Hp * Cp * w_isz          # W2 (VMEM-resident)
                        + (Hp + Cp) * 4            # biases
                        + Bp * Cp * 4),            # output
    )

    out_padded = pl.pallas_call(
        mlp_kernel,
        out_shape=jax.ShapeDtypeStruct((Bp, Cp), jnp.float32),
        grid_spec=pl.GridSpec(
            grid=(n_m, n_k),
            in_specs=[
                pl.BlockSpec((tm, tk), lambda i, k: (i, k)),   # x tile
                pl.BlockSpec((tk, Hp), lambda i, k: (k, 0)),   # W1 K-slice (~2 MiB)
                # b1 / W2 / b2 are VMEM-resident (constant index map).  They are
                # tiny at Hp=Cp=128; single-buffering them only pays off for very
                # large hidden sizes on v7x.
                pl.BlockSpec((1, Hp), lambda i, k: (0, 0)),    # b1
                pl.BlockSpec((Hp, Cp), lambda i, k: (0, 0)),   # W2
                pl.BlockSpec((1, Cp), lambda i, k: (0, 0)),    # b2
            ],
            out_specs=pl.BlockSpec((tm, Cp), lambda i, k: (i, 0)),
            scratch_shapes=[pltpu.VMEM((tm, Hp), jnp.float32)],  # fc1 accumulator
        ),
        compiler_params=pltpu.CompilerParams(
            # With n_m == 1 (the common case) the batch axis is a single step, so
            # W1 is never duplicated across v7x's two TensorCores.
            # TODO(synk): for n_m > 1 on v7x, split K (not batch) across the two
            # TensorCores with per-core partial accumulators + cross-core reduce.
            dimension_semantics=("parallel", "arbitrary"),
            vmem_limit_bytes=_VMEM_LIMIT_BYTES,
        ),
        cost_estimate=cost,
    )(xp, w1p, b1p, w2p, b2p)

    # Slice away lane / batch padding.
    return out_padded[:B, :C]


def text_classifier_forward(x, params, *, tm=None):
    """relu(x @ W1 + b1) @ W2 + b2, with weights prepared by prepare_params()."""
    w1p, b1p, w2p, b2p = params["w1"], params["b1"], params["w2"], params["b2"]
    D, C, tk = params["D"], params["C"], params["tk"]
    assert x.ndim == 2 and x.shape[1] == D, "x must be [batch, input_size]"
    if tm is None:
        tm = _choose_tm(x.shape[0], tk, w1p.shape[1], w2p.shape[1],
                        jnp.dtype(x.dtype).itemsize,
                        jnp.dtype(w1p.dtype).itemsize)
    return _forward_impl(x, w1p, b1p, w2p, b2p, D=D, C=C, tk=tk, tm=tm)


def init_linear(key, in_dim, out_dim, dtype=jnp.float32):
    # Mimic torch.nn.Linear default init: U(-1/sqrt(in_dim), 1/sqrt(in_dim)).
    kw, kb = jax.random.split(key)
    bound = 1.0 / jnp.sqrt(jnp.array(in_dim, dtype))
    w = jax.random.uniform(kw, (in_dim, out_dim), dtype, -bound, bound)
    b = jax.random.uniform(kb, (1, out_dim), dtype, -bound, bound)
    return w, b


def _reference_bf16(x, w1, b1, w2, b2):
    # Same quantization scheme as the kernel (bf16 operands, f32 accumulate).
    xb, w1b, w2b = (a.astype(jnp.bfloat16) for a in (x, w1, w2))
    h = jnp.maximum(
        jnp.dot(xb, w1b, preferred_element_type=jnp.float32) + b1, 0.0)
    return jnp.dot(h.astype(jnp.bfloat16), w2b,
                   preferred_element_type=jnp.float32) + b2


if __name__ == "__main__":
    # Shapes consistent with the module: hidden_size=128, num_classes=2, a small
    # CountVectorizer vocab (256) and a small batch (16 = full bf16 sublane pack).
    batch, input_size, hidden_size, num_classes = 16, 256, 128, 2

    key = jax.random.PRNGKey(0)
    kx, k1, k2, kx2, k3 = jax.random.split(key, 5)

    x = jax.random.normal(kx, (batch, input_size), jnp.float32)
    w1, b1 = init_linear(k1, input_size, hidden_size)
    w2, b2 = init_linear(k2, hidden_size, num_classes)

    # Weight pad/cast happens ONCE here, outside the per-call hot path.
    params = prepare_params(w1, b1, w2, b2)

    out = jax.block_until_ready(text_classifier_forward(x, params))
    assert out.shape == (batch, num_classes)

    ref_q = _reference_bf16(x, w1, b1, w2, b2)
    assert jnp.allclose(out, ref_q, atol=2e-2, rtol=2e-2), "mismatch vs bf16 ref"
    ref_f32 = jnp.maximum(x @ w1 + b1, 0.0) @ w2 + b2
    assert jnp.allclose(out, ref_f32, atol=1e-1, rtol=1e-1), "mismatch vs f32 ref"

    # Unaligned shapes + several K steps exercise the padding path and the
    # pl.when init/finalize K-accumulation.
    B2, D2 = 5, 1000
    x2 = jax.random.normal(kx2, (B2, D2), jnp.float32)
    w1b, b1b = init_linear(k3, D2, hidden_size)
    params2 = prepare_params(w1b, b1b, w2, b2, target_w1_block_bytes=64 * 1024)
    out2 = jax.block_until_ready(text_classifier_forward(x2, params2))
    assert out2.shape == (B2, num_classes)
    ref2_q = _reference_bf16(x2, w1b, b1b, w2, b2)
    assert jnp.allclose(out2, ref2_q, atol=2e-2, rtol=2e-2), "mismatch on padded shapes"

    print("KERNEL_OK")
</pallas_src>

<mosaic_0001>
module attributes {stable_mosaic.version = 11 : i64} {
  func.func @mlp_kernel(%arg0: i32, %arg1: i32, %arg2: memref<16x256xf32, #tpu.memory_space<vmem>>, %arg3: memref<256x128xbf16, #tpu.memory_space<vmem>>, %arg4: memref<1x128xf32, #tpu.memory_space<vmem>>, %arg5: memref<128x128xbf16, #tpu.memory_space<vmem>>, %arg6: memref<1x128xf32, #tpu.memory_space<vmem>>, %arg7: memref<16x128xf32, #tpu.memory_space<vmem>>, %arg8: memref<16x128xf32, #tpu.memory_space<vmem>>) attributes {dimension_semantics = [#tpu.dimension_semantics<parallel>, #tpu.dimension_semantics<arbitrary>], iteration_bounds = array<i64: 1, 1>, scalar_prefetch = 0 : i64, scratch_operands = 1 : i64, tpu.core_type = #tpu.core_type<tc>, window_params = [{transform_indices = @transform_0, window_bounds = array<i64: 16, 256>}, {transform_indices = @transform_1, window_bounds = array<i64: 256, 128>}, {pipeline_mode = #tpu.pipeline_mode<synchronous>, transform_indices = @transform_2, window_bounds = array<i64: 1, 128>}, {pipeline_mode = #tpu.pipeline_mode<synchronous>, transform_indices = @transform_3, window_bounds = array<i64: 128, 128>}, {pipeline_mode = #tpu.pipeline_mode<synchronous>, transform_indices = @transform_4, window_bounds = array<i64: 1, 128>}, {transform_indices = @transform_5, window_bounds = array<i64: 16, 128>}]} {
    %c0_i32 = arith.constant 0 : i32
    %0 = arith.cmpi eq, %arg1, %c0_i32 : i32
    %1 = arith.extui %0 : i1 to i32
    %c0_i32_0 = arith.constant 0 : i32
    %2 = arith.cmpi ne, %1, %c0_i32_0 : i32
    scf.if %2 {
      %c0_10 = arith.constant 0 : index
      %c0_11 = arith.constant 0 : index
      %13 = vector.load %arg4[%c0_10, %c0_11] : memref<1x128xf32, #tpu.memory_space<vmem>>, vector<1x128xf32>
      %14 = vector.shape_cast %13 : vector<1x128xf32> to vector<1x128xf32>
      %15 = vector.broadcast %14 : vector<1x128xf32> to vector<16x128xf32>
      %c0_12 = arith.constant 0 : index
      %c0_13 = arith.constant 0 : index
      %16 = vector.load %arg8[%c0_12, %c0_13] : memref<16x128xf32, #tpu.memory_space<vmem>>, vector<16x128xf32>
      tpu.vector_store %arg8[%c0_12, %c0_13], %15 {strides = array<i32>} : memref<16x128xf32, #tpu.memory_space<vmem>>, vector<16x128xf32>,
    } else {
    }
    %c0 = arith.constant 0 : index
    %c0_1 = arith.constant 0 : index
    %3 = vector.load %arg8[%c0, %c0_1] : memref<16x128xf32, #tpu.memory_space<vmem>>, vector<16x128xf32>
    %c0_2 = arith.constant 0 : index
    %c0_3 = arith.constant 0 : index
    %4 = vector.load %arg2[%c0_2, %c0_3] : memref<16x256xf32, #tpu.memory_space<vmem>>, vector<16x256xf32>
    %5 = arith.truncf %4 : vector<16x256xf32> to vector<16x256xbf16>
    %c0_4 = arith.constant 0 : index
    %c0_5 = arith.constant 0 : index
    %6 = vector.load %arg3[%c0_4, %c0_5] : memref<256x128xbf16, #tpu.memory_space<vmem>>, vector<256x128xbf16>
    %cst = arith.constant dense<0.000000e+00> : vector<16x128xf32>
    %7 = tpu.matmul %5, %6, %cst {dimension_numbers = #tpu.dot_dimension_numbers<[1], [0], [0], [1], [0, 0, 1, 1], [], []>} : vector<16x256xbf16>, vector<256x128xbf16>, vector<16x128xf32> -> vector<16x128xf32>
    %8 = arith.addf %3, %7 : vector<16x128xf32>
    %c0_6 = arith.constant 0 : index
    %c0_7 = arith.constant 0 : index
    %9 = vector.load %arg8[%c0_6, %c0_7] : memref<16x128xf32, #tpu.memory_space<vmem>>, vector<16x128xf32>
    tpu.vector_store %arg8[%c0_6, %c0_7], %8 {strides = array<i32>} : memref<16x128xf32, #tpu.memory_space<vmem>>, vector<16x128xf32>,
    %c0_i32_8 = arith.constant 0 : i32
    %10 = arith.cmpi eq, %arg1, %c0_i32_8 : i32
    %11 = arith.extui %10 : i1 to i32
    %c0_i32_9 = arith.constant 0 : i32
    %12 = arith.cmpi ne, %11, %c0_i32_9 : i32
    scf.if %12 {
      %c0_10 = arith.constant 0 : index
      %c0_11 = arith.constant 0 : index
      %13 = vector.load %arg8[%c0_10, %c0_11] : memref<16x128xf32, #tpu.memory_space<vmem>>, vector<16x128xf32>
      %cst_12 = arith.constant 0.000000e+00 : f32
      %14 = vector.broadcast %cst_12 : f32 to vector<16x128xf32>
      %15 = arith.maximumf %13, %14 : vector<16x128xf32>
      %16 = arith.truncf %15 : vector<16x128xf32> to vector<16x128xbf16>
      %c0_13 = arith.constant 0 : index
      %c0_14 = arith.constant 0 : index
      %17 = vector.load %arg5[%c0_13, %c0_14] : memref<128x128xbf16, #tpu.memory_space<vmem>>, vector<128x128xbf16>
      %cst_15 = arith.constant dense<0.000000e+00> : vector<16x128xf32>
      %18 = tpu.matmul %16, %17, %cst_15 {dimension_numbers = #tpu.dot_dimension_numbers<[1], [0], [0], [1], [0, 0, 1, 1], [], []>} : vector<16x128xbf16>, vector<128x128xbf16>, vector<16x128xf32> -> vector<16x128xf32>
      %c0_16 = arith.constant 0 : index
      %c0_17 = arith.constant 0 : index
      %19 = vector.load %arg6[%c0_16, %c0_17] : memref<1x128xf32, #tpu.memory_space<vmem>>, vector<1x128xf32>
      %20 = vector.broadcast %19 : vector<1x128xf32> to vector<16x128xf32>
      %21 = arith.addf %18, %20 : vector<16x128xf32>
      %c0_18 = arith.constant 0 : index
      %c0_19 = arith.constant 0 : index
      %22 = vector.load %arg7[%c0_18, %c0_19] : memref<16x128xf32, #tpu.memory_space<vmem>>, vector<16x128xf32>
      tpu.vector_store %arg7[%c0_18, %c0_19], %21 {strides = array<i32>} : memref<16x128xf32, #tpu.memory_space<vmem>>, vector<16x128xf32>,
    } else {
    }
    return
  }
  func.func @transform_0(%arg0: i32, %arg1: i32) -> (i32, i32) {
    %c0_i32 = arith.constant 0 : i32
    return %arg0, %arg1 : i32, i32
  }
  func.func @transform_1(%arg0: i32, %arg1: i32) -> (i32, i32) {
    %c0_i32 = arith.constant 0 : i32
    %c0_i32_0 = arith.constant 0 : i32
    return %arg1, %c0_i32 : i32, i32
  }
  func.func @transform_2(%arg0: i32, %arg1: i32) -> (i32, i32) {
    %c0_i32 = arith.constant 0 : i32
    %c0_i32_0 = arith.constant 0 : i32
    %c0_i32_1 = arith.constant 0 : i32
    return %c0_i32, %c0_i32_0 : i32, i32
  }
  func.func @transform_3(%arg0: i32, %arg1: i32) -> (i32, i32) {
    %c0_i32 = arith.constant 0 : i32
    %c0_i32_0 = arith.constant 0 : i32
    %c0_i32_1 = arith.constant 0 : i32
    return %c0_i32, %c0_i32_0 : i32, i32
  }
  func.func @transform_4(%arg0: i32, %arg1: i32) -> (i32, i32) {
    %c0_i32 = arith.constant 0 : i32
    %c0_i32_0 = arith.constant 0 : i32
    %c0_i32_1 = arith.constant 0 : i32
    return %c0_i32, %c0_i32_0 : i32, i32
  }
  func.func @transform_5(%arg0: i32, %arg1: i32) -> (i32, i32) {
    %c0_i32 = arith.constant 0 : i32
    %c0_i32_0 = arith.constant 0 : i32
    return %arg0, %c0_i32 : i32, i32
  }
}

</mosaic_0001>

<llo_original>
// kernel: _forward_impl.1
$region0: #{_forward_impl.1}
  #allocation0 [shape = 'u32[]', space=smem, size = 0x4, offset = 0x4, fixed_abs, tag = 'smem constant byte address 0x4 - core index']
  #allocation1 [shape = 'u32[72,128]{1,0:T(1,128)}', space=vmem, size = 0x9000, scoped, tag = 'internal scratch']
  #allocation2 [shape = 'f32[16,128]{1,0:T(8,128)}', space=vmem, size = 0x2000, scoped, tag = 'scratch operand']
  %s0 = inlined_call_operand.hbm [shape: f32[16,256], index: 0, kind: input, shape index: {}]
  %s1 = inlined_call_operand.hbm [shape: bf16[256,128], index: 1, kind: input, shape index: {}]
  %s2 = inlined_call_operand.vmem [shape: f32[1,128], index: 2, kind: input, shape index: {}]
  %s3 = inlined_call_operand.hbm [shape: bf16[128,128], index: 3, kind: input, shape index: {}]
  %s4 = inlined_call_operand.vmem [shape: f32[1,128], index: 4, kind: input, shape index: {}]
  %s5 = inlined_call_operand.vmem [shape: f32[16,128], index: 5, kind: output, shape index: {}]
  %s6 = sld [smem:[#allocation0]]
  $region50: #{_forward_impl.1} parent=0
    _
  %s8 = ssub.s32 1, %s6
  %s9 = scalar_select 0, %s8, %s6
  $region1: #{_forward_impl.1} parent=0
    #allocation3 [shape = 'u8[16384]{0}', space=vmem, size = 0x4000, scoped, tag = 'input window, operand 0, single buffered']
    #allocation4 [shape = 's32[1]{0}', space=sflag, size = 0x4, scoped, tag = 'scoped memory for _forward_impl.1']
    #allocation5 [shape = 'u8[65536]{0}', space=vmem, size = 0x10000, scoped, tag = 'input window, operand 1, single buffered']
    #allocation6 [shape = 's32[1]{0}', space=sflag, size = 0x4, scoped, tag = 'scoped memory for _forward_impl.1']
    #allocation7 [shape = 'u8[32768]{0}', space=vmem, size = 0x8000, scoped, tag = 'input window, operand 3, single buffered']
    %10 = vsyncpa [#allocation4], 0
    %11 = vsyncpa [#allocation6], 0
    // Predicated region
    $region2: #{_forward_impl.1} parent=1 // pred_check
      _
    $region3: #{_forward_impl.1} parent=1 // pred_check_branch
      %13 = sbr.rel (0) target = $region5
    $region4: #{_forward_impl.1} parent=1 // pred_region
      %15 = vsyncadd [#allocation4], 0
      %s16 = sshll.u32 %s0, 4
      %s17 = int_to_ptr.hbm [resolvable:$true] %s16
      %s18 = sshll.u32 [#allocation3], 4
      %s19 = int_to_ptr.vmem [resolvable:$true] %s18
      %24 = dma.hbm_to_vmem [thread:$0]  %s17, 512, %s19, [#allocation4], 256, 256, 16
    $region5: #{_forward_impl.1} parent=1 // pred_fallthru
      _
    // Predicated region
    $region6: #{_forward_impl.1} parent=1 // pred_check
      _
    $region7: #{_forward_impl.1} parent=1 // pred_check_branch
      %26 = sbr.rel (0) target = $region9
    $region8: #{_forward_impl.1} parent=1 // pred_region
      %28 = vsyncadd [#allocation6], 0
      %s29 = sshll.u32 %s1, 4
      %s30 = int_to_ptr.hbm [resolvable:$true] %s29
      %s31 = sshll.u32 [#allocation5], 4
      %s32 = int_to_ptr.vmem [resolvable:$true] %s31
      %37 = dma.hbm_to_vmem [thread:$0]  %s30, 2048, %s32, [#allocation6], 64, 64, 4
    $region9: #{_forward_impl.1} parent=1 // pred_fallthru
      _
    // Predicated region
    $region10: #{_forward_impl.1} parent=1 // pred_check
      _
    $region11: #{_forward_impl.1} parent=1 // pred_check_branch
      %39 = sbr.rel (0) target = $region13
    $region12: #{_forward_impl.1} parent=1 // pred_region
      _
    $region13: #{_forward_impl.1} parent=1 // pred_fallthru
      _
    // Predicated region
    $region14: #{_forward_impl.1} parent=1 // pred_check
      _
    $region15: #{_forward_impl.1} parent=1 // pred_check_branch
      %41 = sbr.rel (0) target = $region17
    $region16: #{_forward_impl.1} parent=1 // pred_region
      %43 = vsyncadd [#allocation6], 0
      %s44 = sshll.u32 %s3, 4
      %s45 = int_to_ptr.hbm [resolvable:$true] %s44
      %s46 = sshll.u32 [#allocation7], 4
      %s47 = int_to_ptr.vmem [resolvable:$true] %s46
      %52 = dma.hbm_to_vmem [thread:$0]  %s45, 1024, %s47, [#allocation6], 64, 64, 4
    $region17: #{_forward_impl.1} parent=1 // pred_fallthru
      _
    // Predicated region
    $region18: #{_forward_impl.1} parent=1 // pred_check
      _
    $region19: #{_forward_impl.1} parent=1 // pred_check_branch
      %54 = sbr.rel (0) target = $region21
    $region20: #{_forward_impl.1} parent=1 // pred_region
      _
    $region21: #{_forward_impl.1} parent=1 // pred_fallthru
      _
    // Predicated region
    $region22: #{_forward_impl.1} parent=1 // pred_check
      _
    $region23: #{_forward_impl.1} parent=1 // pred_check_branch
      %56 = sbr.rel (0) target = $region25
    $region24: #{_forward_impl.1} parent=1 // pred_region
      %58 = dma.done [#allocation4], 512
    $region25: #{_forward_impl.1} parent=1 // pred_fallthru
      _
    // Predicated region
    $region26: #{_forward_impl.1} parent=1 // pred_check
      _
    $region27: #{_forward_impl.1} parent=1 // pred_check_branch
      %60 = sbr.rel (0) target = $region29
    $region28: #{_forward_impl.1} parent=1 // pred_region
      %62 = dma.done [#allocation6], 2048
    $region29: #{_forward_impl.1} parent=1 // pred_fallthru
      _
    // Predicated region
    $region30: #{_forward_impl.1} parent=1 // pred_check
      _
    $region31: #{_forward_impl.1} parent=1 // pred_check_branch
      %64 = sbr.rel (0) target = $region33
    $region32: #{_forward_impl.1} parent=1 // pred_region
      %66 = dma.done [#allocation6], 1024
    $region33: #{_forward_impl.1} parent=1 // pred_fallthru
      _
    %p67 = scmp.eq.s32.totalorder 0, 0
    // Predicated region
    $region34: #{_forward_impl.1} parent=1 // pred_check
      %p68 = pneg %p67
    $region35: #{_forward_impl.1} parent=1 // pred_check_branch
      %70 = sbr.rel (%p68) target = $region37
    $region36: #{_forward_impl.1} parent=1 // pred_region
      %v71 = vld [vmem:[%s2] sm:$0x1]
      %v73 = vperm.slane %v71, 0
      %75 = vst [vmem:[#allocation2] sm:$0xff] %v73
      %76 = vst [vmem:[#allocation2 + $0x8] sm:$0xff] %v73
    $region37: #{_forward_impl.1} parent=1 // pred_fallthru
      _
    %v77 = vld [vmem:[#allocation2] sm:$0xff]
    %v78 = vld [vmem:[#allocation2 + $0x8] sm:$0xff]
    %v79 = vld [vmem:[#allocation3] sm:$0xff]
    %v80 = vld [vmem:[#allocation3 + $0x8] sm:$0xff]
    %v81 = vld [vmem:[#allocation3 + $0x10] sm:$0xff]
    %v82 = vld [vmem:[#allocation3 + $0x18] sm:$0xff]
    %v83 = vpack.c.bf16 %v81, %v79
    %v84 = vpack.c.bf16 %v82, %v80
    %v85 = vld [vmem:[#allocation5] sm:$0xf]
    %v86 = vld [vmem:[#allocation5 + $0x4] sm:$0xf]
    %v87 = vld [vmem:[#allocation5 + $0x8] sm:$0xf]
    %v88 = vld [vmem:[#allocation5 + $0xc] sm:$0xf]
    %v89 = vld [vmem:[#allocation5 + $0x10] sm:$0xf]
    %v90 = vld [vmem:[#allocation5 + $0x14] sm:$0xf]
    %v91 = vld [vmem:[#allocation5 + $0x18] sm:$0xf]
    %v92 = vld [vmem:[#allocation5 + $0x1c] sm:$0xf]
    %v93 = vld [vmem:[#allocation5 + $0x20] sm:$0xf]
    %v94 = vld [vmem:[#allocation5 + $0x24] sm:$0xf]
    %v95 = vld [vmem:[#allocation5 + $0x28] sm:$0xf]
    %v96 = vld [vmem:[#allocation5 + $0x2c] sm:$0xf]
    %v97 = vld [vmem:[#allocation5 + $0x30] sm:$0xf]
    %v98 = vld [vmem:[#allocation5 + $0x34] sm:$0xf]
    %v99 = vld [vmem:[#allocation5 + $0x38] sm:$0xf]
    %v100 = vld [vmem:[#allocation5 + $0x3c] sm:$0xf]
    %v101 = vld [vmem:[#allocation5 + $0x40] sm:$0xf]
    %v102 = vld [vmem:[#allocation5 + $0x44] sm:$0xf]
    %v103 = vld [vmem:[#allocation5 + $0x48] sm:$0xf]
    %v104 = vld [vmem:[#allocation5 + $0x4c] sm:$0xf]
    %v105 = vld [vmem:[#allocation5 + $0x50] sm:$0xf]
    %v106 = vld [vmem:[#allocation5 + $0x54] sm:$0xf]
    %v107 = vld [vmem:[#allocation5 + $0x58] sm:$0xf]
    %v108 = vld [vmem:[#allocation5 + $0x5c] sm:$0xf]
    %v109 = vld [vmem:[#allocation5 + $0x60] sm:$0xf]
    %v110 = vld [vmem:[#allocation5 + $0x64] sm:$0xf]
    %v111 = vld [vmem:[#allocation5 + $0x68] sm:$0xf]
    %v112 = vld [vmem:[#allocation5 + $0x6c] sm:$0xf]
    %v113 = vld [vmem:[#allocation5 + $0x70] sm:$0xf]
    %v114 = vld [vmem:[#allocation5 + $0x74] sm:$0xf]
    %v115 = vld [vmem:[#allocation5 + $0x78] sm:$0xf]
    %v116 = vld [vmem:[#allocation5 + $0x7c] sm:$0xf]
    %v149 = vunpack.c.l.b16 %v85
    %v150 = vunpack.c.l.b16 %v86
    %v151 = vunpack.c.l.b16 %v87
    %v152 = vunpack.c.l.b16 %v88
    %v153 = vunpack.c.l.b16 %v89
    %v154 = vunpack.c.l.b16 %v90
    %v155 = vunpack.c.l.b16 %v91
    %v156 = vunpack.c.l.b16 %v92
    %v157 = vunpack.c.l.b16 %v93
    %v158 = vunpack.c.l.b16 %v94
    %v159 = vunpack.c.l.b16 %v95
    %v160 = vunpack.c.l.b16 %v96
    %v161 = vunpack.c.l.b16 %v97
    %v162 = vunpack.c.l.b16 %v98
    %v163 = vunpack.c.l.b16 %v99
    %v164 = vunpack.c.l.b16 %v100
    %v165 = vunpack.c.l.b16 %v101
    %v166 = vunpack.c.l.b16 %v102
    %v167 = vunpack.c.l.b16 %v103
    %v168 = vunpack.c.l.b16 %v104
    %v169 = vunpack.c.l.b16 %v105
    %v170 = vunpack.c.l.b16 %v106
    %v171 = vunpack.c.l.b16 %v107
    %v172 = vunpack.c.l.b16 %v108
    %v173 = vunpack.c.l.b16 %v109
    %v174 = vunpack.c.l.b16 %v110
    %v175 = vunpack.c.l.b16 %v111
    %v176 = vunpack.c.l.b16 %v112
    %v177 = vunpack.c.l.b16 %v113
    %v178 = vunpack.c.l.b16 %v114
    %v179 = vunpack.c.l.b16 %v115
    %v180 = vunpack.c.l.b16 %v116
    %v181 = vpack.c.b16 %v150, %v149
    %v182 = vpack.c.b16 %v152, %v151
    %v183 = vpack.c.b16 %v154, %v153
    %v184 = vpack.c.b16 %v156, %v155
    %v185 = vpack.c.b16 %v158, %v157
    %v186 = vpack.c.b16 %v160, %v159
    %v187 = vpack.c.b16 %v162, %v161
    %v188 = vpack.c.b16 %v164, %v163
    %v189 = vpack.c.b16 %v166, %v165
    %v190 = vpack.c.b16 %v168, %v167
    %v191 = vpack.c.b16 %v170, %v169
    %v192 = vpack.c.b16 %v172, %v171
    %v193 = vpack.c.b16 %v174, %v173
    %v194 = vpack.c.b16 %v176, %v175
    %v195 = vpack.c.b16 %v178, %v177
    %v196 = vpack.c.b16 %v180, %v179
    %213 = vmatpush.bf16.msra.mxu0 %v188
    %214 = vmatpush.bf16.msra.mxu0 %v187
    %215 = vmatpush.bf16.msra.mxu0 %v186
    %216 = vmatpush.bf16.msra.mxu0 %v185
    %217 = vmatpush.bf16.msra.mxu0 %v184
    %218 = vmatpush.bf16.msra.mxu0 %v183
    %219 = vmatpush.bf16.msra.mxu0 %v182
    %220 = vmatpush.bf16.msra.mxu0 %v181
    %221 = vmatmul.bf16.gmra.mxu0 %v83
    %v222 = vpop.f32.mrf.mxu0
    %v223 = vadd.f32 0.0, %v222
    %v224 = vpop.f32.mrf.mxu0
    %v225 = vadd.f32 0.0, %v224
    %226 = vdwg.mxu0
    %227 = vmatpush.bf16.msra.mxu0 %v196
    %228 = vmatpush.bf16.msra.mxu0 %v195
    %229 = vmatpush.bf16.msra.mxu0 %v194
    %230 = vmatpush.bf16.msra.mxu0 %v193
    %231 = vmatpush.bf16.msra.mxu0 %v192
    %232 = vmatpush.bf16.msra.mxu0 %v191
    %233 = vmatpush.bf16.msra.mxu0 %v190
    %234 = vmatpush.bf16.msra.mxu0 %v189
    %235 = vmatmul.bf16.gmra.mxu0 %v84
    %v236 = vpop.f32.mrf.mxu0
    %v237 = vadd.f32 %v223, %v236
    %v238 = vpop.f32.mrf.mxu0
    %v239 = vadd.f32 %v225, %v238
    %240 = vdwg.mxu0
    %v241 = vadd.f32 %v77, %v237
    %v242 = vadd.f32 %v78, %v239
    %243 = vst [vmem:[#allocation2] sm:$0xff] %v241
    %244 = vst [vmem:[#allocation2 + $0x8] sm:$0xff] %v242
    // Predicated region
    $region38: #{_forward_impl.1} parent=1 // pred_check
      %p245 = pneg %p67
    $region39: #{_forward_impl.1} parent=1 // pred_check_branch
      %247 = sbr.rel (%p245) target = $region41
    $region40: #{_forward_impl.1} parent=1 // pred_region
      %v248 = vld [vmem:[#allocation2] sm:$0xff]
      %v249 = vld [vmem:[#allocation2 + $0x8] sm:$0xff]
      %v250 = vmax.f32 %v248, 0.0
      %v251 = vmax.f32 %v249, 0.0
      %v252 = vpack.c.bf16 %v251, %v250
      %v253 = vld [vmem:[#allocation7] sm:$0xf]
      %v254 = vld [vmem:[#allocation7 + $0x4] sm:$0xf]
      %v255 = vld [vmem:[#allocation7 + $0x8] sm:$0xf]
      %v256 = vld [vmem:[#allocation7 + $0xc] sm:$0xf]
      %v257 = vld [vmem:[#allocation7 + $0x10] sm:$0xf]
      %v258 = vld [vmem:[#allocation7 + $0x14] sm:$0xf]
      %v259 = vld [vmem:[#allocation7 + $0x18] sm:$0xf]
      %v260 = vld [vmem:[#allocation7 + $0x1c] sm:$0xf]
      %v261 = vld [vmem:[#allocation7 + $0x20] sm:$0xf]
      %v262 = vld [vmem:[#allocation7 + $0x24] sm:$0xf]
      %v263 = vld [vmem:[#allocation7 + $0x28] sm:$0xf]
      %v264 = vld [vmem:[#allocation7 + $0x2c] sm:$0xf]
      %v265 = vld [vmem:[#allocation7 + $0x30] sm:$0xf]
      %v266 = vld [vmem:[#allocation7 + $0x34] sm:$0xf]
      %v267 = vld [vmem:[#allocation7 + $0x38] sm:$0xf]
      %v268 = vld [vmem:[#allocation7 + $0x3c] sm:$0xf]
      %v269 = vld [vmem:[%s4] sm:$0x1]
      %v271 = vperm.slane %v269, 0
      %v289 = vunpack.c.l.b16 %v253
      %v290 = vunpack.c.l.b16 %v254
      %v291 = vunpack.c.l.b16 %v255
      %v292 = vunpack.c.l.b16 %v256
      %v293 = vunpack.c.l.b16 %v257
      %v294 = vunpack.c.l.b16 %v258
      %v295 = vunpack.c.l.b16 %v259
      %v296 = vunpack.c.l.b16 %v260
      %v297 = vunpack.c.l.b16 %v261
      %v298 = vunpack.c.l.b16 %v262
      %v299 = vunpack.c.l.b16 %v263
      %v300 = vunpack.c.l.b16 %v264
      %v301 = vunpack.c.l.b16 %v265
      %v302 = vunpack.c.l.b16 %v266
      %v303 = vunpack.c.l.b16 %v267
      %v304 = vunpack.c.l.b16 %v268
      %v305 = vpack.c.b16 %v290, %v289
      %v306 = vpack.c.b16 %v292, %v291
      %v307 = vpack.c.b16 %v294, %v293
      %v308 = vpack.c.b16 %v296, %v295
      %v309 = vpack.c.b16 %v298, %v297
      %v310 = vpack.c.b16 %v300, %v299
      %v311 = vpack.c.b16 %v302, %v301
      %v312 = vpack.c.b16 %v304, %v303
      %321 = vmatpush.bf16.msra.mxu0 %v312
      %322 = vmatpush.bf16.msra.mxu0 %v311
      %323 = vmatpush.bf16.msra.mxu0 %v310
      %324 = vmatpush.bf16.msra.mxu0 %v309
      %325 = vmatpush.bf16.msra.mxu0 %v308
      %326 = vmatpush.bf16.msra.mxu0 %v307
      %327 = vmatpush.bf16.msra.mxu0 %v306
      %328 = vmatpush.bf16.msra.mxu0 %v305
      %329 = vmatmul.bf16.gmra.mxu0 %v252
      %v330 = vpop.f32.mrf.mxu0
      %v331 = vadd.f32 %v271, %v330
      %v332 = vpop.f32.mrf.mxu0
      %v333 = vadd.f32 %v271, %v332
      %334 = vdwg.mxu0
      %335 = vst [vmem:[%s5] sm:$0xff] %v331
      %336 = vst [vmem:[%s5 + $0x8] sm:$0xff] %v333
    $region41: #{_forward_impl.1} parent=1 // pred_fallthru
      _
    // Predicated region
    $region42: #{_forward_impl.1} parent=1 // pred_check
      _
    $region43: #{_forward_impl.1} parent=1 // pred_check_branch
      %338 = sbr.rel (0) target = $region45
    $region44: #{_forward_impl.1} parent=1 // pred_region
      _
    $region45: #{_forward_impl.1} parent=1 // pred_fallthru
      _
    // Predicated region
    $region46: #{_forward_impl.1} parent=1 // pred_check
      _
    $region47: #{_forward_impl.1} parent=1 // pred_check_branch
      %340 = sbr.rel (0) target = $region49
    $region48: #{_forward_impl.1} parent=1 // pred_region
      _
    $region49: #{_forward_impl.1} parent=1 // pred_fallthru
      _
    %341 = vsyncpa [#allocation4], 1
    %342 = vsyncpa [#allocation6], 1

</llo_original>
